<compile_context>
chip_gen: v5e
topology: v5e:2x2
jax: 0.10.0
libtpu: 0.0.40
codegen_flags: <defaults>
</compile_context>

<pallas_src>
import jax
import jax.numpy as jnp
from jax.experimental import pallas as pl
from jax.experimental.pallas import tpu as pltpu

_SUBLANE = 8
_DEF_TM = 512   # max rows per tile
_DEF_TN = 512   # max output-column (hidden) tile width


def _round_up(a, b):
    return ((a + b - 1) // b) * b


def _vmem_capacity_bytes():
    try:
        return int(pltpu.get_tpu_info().vmem_capacity_bytes)
    except Exception:
        return 64 << 20   # conservative default (v7x per-TensorCore VMEM)


def _mlp_kernel(x_ref, w1_ref, b1_ref, w2_ref, b2_ref, o_ref, h_ref):
    """Fused  out = ReLU(x @ W1 + b1) @ W2 + b2  for one (row, col) tile."""
    # The hidden activation depends only on the row tile; recompute it only
    # when a new row tile starts (the column axis is the inner grid axis).
    @pl.when(pl.program_id(1) == 0)
    def _():
        h = jnp.dot(x_ref[...].astype(w1_ref.dtype), w1_ref[...],
                    preferred_element_type=jnp.float32)
        # bias + ReLU in f32 on the VPU; store in compute dtype for the MXU.
        h_ref[...] = jnp.maximum(h + b1_ref[...], 0.0).astype(h_ref.dtype)

    y = jnp.dot(h_ref[...], w2_ref[...], preferred_element_type=jnp.float32)
    o_ref[...] = (y + b2_ref[...]).astype(o_ref.dtype)


def prepare_params(w1, b1, w2, b2, *, compute_dtype=jnp.bfloat16):
    """One-time weight preparation (hoisted out of the per-call path).

    w1: (in_features, hidden), w2: (hidden, hidden) — stored transposed vs.
    PyTorch so the kernel computes x @ W.  Matmul operands are cast to
    `compute_dtype` (bf16 default: native MXU rate, half the DMA/VMEM bytes);
    biases stay float32.  Pass compute_dtype=jnp.float32 for a bit-faithful
    f32 mode.
    """
    in_f, hidden = w1.shape
    return {
        "w1": jnp.asarray(w1).astype(compute_dtype),
        "w2": jnp.asarray(w2).astype(compute_dtype),
        "b1": jnp.asarray(b1).reshape(1, hidden).astype(jnp.float32),
        "b2": jnp.asarray(b2).reshape(1, hidden).astype(jnp.float32),
        "in_features": int(in_f),
        "hidden": int(hidden),
        "compute_dtype": jnp.dtype(compute_dtype),
    }


def _choose_tiles(M, in_f, hidden, x_bytes, c_bytes, o_bytes, budget,
                  tm_max=_DEF_TM, tn_max=_DEF_TN):
    tn = hidden if hidden <= tn_max else tn_max

    def footprint(tm):
        x_t = 2 * tm * in_f * x_bytes        # x tile (double-buffered)
        o_t = 2 * tm * tn * o_bytes          # out tile (double-buffered)
        h_s = tm * hidden * c_bytes          # hidden-activation scratch
        w1_ = 2 * in_f * hidden * c_bytes    # conservative: assume 2 buffers
        w2_ = 2 * hidden * tn * c_bytes
        b_ = 2 * hidden * 4 + 2 * tn * 4
        return x_t + o_t + h_s + w1_ + w2_ + b_

    tm = tm_max
    while tm > _SUBLANE and footprint(tm) > budget:
        tm //= 2
    tm = max(_SUBLANE, tm)

    # Balance row tiles (avoid up-to-tm-1 rows of padded MXU work) and use
    # >= 2 row tiles when possible so the "parallel" axis can span both
    # TensorCores on v7x (single-TC v5e/v6e are unaffected).
    nt = pl.cdiv(M, tm)
    if M >= 2 * _SUBLANE:
        nt = max(nt, 2)
    tm = min(tm, _round_up(pl.cdiv(M, nt), _SUBLANE))
    return tm, tn


def mlp_proto_forward(x, params, *, tm_max=_DEF_TM):
    """x: (B, N, in_features) -> (B, N, hidden) via the fused Pallas kernel."""
    B, N, in_f = x.shape
    assert in_f == params["in_features"]
    hidden = params["hidden"]
    c_dtype = params["compute_dtype"]
    out_dtype = x.dtype
    M = B * N

    # No activation padding/copies: blocks whose extents equal the full array
    # dims satisfy the TPU tiling rules; ragged row/column tails are handled by
    # Pallas' masked partial loads/stores (OOB stores dropped, OOB reads only
    # feed rows/columns that are never stored).
    x_flat = x.reshape(M, in_f)

    cap = _vmem_capacity_bytes()
    tm, tn = _choose_tiles(
        M, in_f, hidden,
        x_bytes=x_flat.dtype.itemsize,
        c_bytes=c_dtype.itemsize,
        o_bytes=jnp.dtype(out_dtype).itemsize,
        budget=int(0.55 * cap),
        tm_max=tm_max)
    grid = (pl.cdiv(M, tm), pl.cdiv(hidden, tn))
    nj = grid[1]

    cost = pl.CostEstimate(
        flops=2 * M * (in_f * hidden + hidden * hidden),
        transcendentals=0,
        bytes_accessed=(x_flat.size * x_flat.dtype.itemsize
                        + params["w1"].size * params["w1"].dtype.itemsize
                        + params["w2"].size * params["w2"].dtype.itemsize
                        + 2 * hidden * 4
                        + M * hidden * jnp.dtype(out_dtype).itemsize))

    def build(single_buffer_weights):
        resident = ({"pipeline_mode": pl.Buffered(1)}
                    if single_buffer_weights else {})
        # W2/b2 only have constant index maps when hidden fits one column tile.
        resident_w2 = resident if nj == 1 else {}
        in_specs = [
            pl.BlockSpec((tm, in_f), lambda i, j: (i, 0)),                    # x (reused over j)
            pl.BlockSpec((in_f, hidden), lambda i, j: (0, 0), **resident),    # W1 resident
            pl.BlockSpec((1, hidden), lambda i, j: (0, 0), **resident),       # b1 resident
            pl.BlockSpec((hidden, tn), lambda i, j: (0, j), **resident_w2),   # W2 column tile
            pl.BlockSpec((1, tn), lambda i, j: (0, j), **resident_w2),        # b2 column tile
        ]
        return pl.pallas_call(
            _mlp_kernel,
            out_shape=jax.ShapeDtypeStruct((M, hidden), out_dtype),
            grid_spec=pltpu.PrefetchScalarGridSpec(
                num_scalar_prefetch=0,
                grid=grid,
                in_specs=in_specs,
                out_specs=pl.BlockSpec((tm, tn), lambda i, j: (i, j)),
                scratch_shapes=[pltpu.VMEM((tm, hidden), c_dtype)],
            ),
            compiler_params=pltpu.CompilerParams(
                dimension_semantics=("parallel", "arbitrary"),
                vmem_limit_bytes=int(0.85 * cap)),
            cost_estimate=cost,
        )

    args = (x_flat, params["w1"], params["b1"], params["w2"], params["b2"])
    # Prefer single-buffered resident weights (halves their VMEM footprint);
    # fall back to default double-buffering if this JAX build rejects
    # pl.Buffered(1) for the main pallas_call pipeline.
    try:
        out_flat = build(True)(*args)
    except Exception:
        out_flat = build(False)(*args)

    return out_flat.reshape(B, N, hidden)


def init_params(key, in_features, hidden):
    """Deterministic init mimicking PyTorch Linear default U[-1/sqrt(fan_in), +]."""
    k1, k2, k3, k4 = jax.random.split(key, 4)
    lim1 = 1.0 / jnp.sqrt(jnp.float32(in_features))
    lim2 = 1.0 / jnp.sqrt(jnp.float32(hidden))
    # Stored as (fan_in, fan_out) so the kernel does x @ W.
    w1 = jax.random.uniform(k1, (in_features, hidden), jnp.float32, -lim1, lim1)
    b1 = jax.random.uniform(k2, (hidden,), jnp.float32, -lim1, lim1)
    w2 = jax.random.uniform(k3, (hidden, hidden), jnp.float32, -lim2, lim2)
    b2 = jax.random.uniform(k4, (hidden,), jnp.float32, -lim2, lim2)
    return w1, b1, w2, b2


if __name__ == "__main__":
    # MLPProto(in_features=32, out_features=32, hidden_sizes=32); drop_p unused.
    B, N, IN_F, HIDDEN = 2, 8, 32, 32

    key = jax.random.PRNGKey(0)
    kx, kp = jax.random.split(key)
    x = jax.random.normal(kx, (B, N, IN_F), jnp.float32)
    w1, b1, w2, b2 = init_params(kp, IN_F, HIDDEN)

    # High-precision f32 reference (same math as the PyTorch forward).
    x_flat = x.reshape(-1, IN_F)
    hi = jax.lax.Precision.HIGHEST
    ref = jnp.maximum(jnp.dot(x_flat, w1, precision=hi) + b1, 0.0)
    ref = (jnp.dot(ref, w2, precision=hi) + b2).reshape(B, N, HIDDEN)

    # Default path: bf16 MXU operands, f32 accumulation / bias / ReLU.
    params_bf16 = prepare_params(w1, b1, w2, b2)
    out = jax.block_until_ready(mlp_proto_forward(x, params_bf16))
    assert out.shape == (B, N, HIDDEN)
    assert jnp.allclose(out, ref, atol=5e-2, rtol=5e-2), "bf16 path mismatch"

    # Bit-faithful f32 path.
    params_f32 = prepare_params(w1, b1, w2, b2, compute_dtype=jnp.float32)
    out32 = jax.block_until_ready(mlp_proto_forward(x, params_f32))
    assert jnp.allclose(out32, ref, atol=5e-3, rtol=5e-3), "f32 path mismatch"

    print("KERNEL_OK")
</pallas_src>

<mosaic_0001>
module attributes {stable_mosaic.version = 11 : i64} {
  func.func @_mlp_kernel(%arg0: i32, %arg1: i32, %arg2: memref<8x32xf32, #tpu.memory_space<vmem>>, %arg3: memref<32x32xbf16, #tpu.memory_space<vmem>>, %arg4: memref<1x32xf32, #tpu.memory_space<vmem>>, %arg5: memref<32x32xbf16, #tpu.memory_space<vmem>>, %arg6: memref<1x32xf32, #tpu.memory_space<vmem>>, %arg7: memref<8x32xf32, #tpu.memory_space<vmem>>, %arg8: memref<8x32xbf16, #tpu.memory_space<vmem>>) attributes {dimension_semantics = [#tpu.dimension_semantics<parallel>, #tpu.dimension_semantics<arbitrary>], iteration_bounds = array<i64: 2, 1>, scalar_prefetch = 0 : i64, scratch_operands = 1 : i64, tpu.core_type = #tpu.core_type<tc>, window_params = [{transform_indices = @transform_0, window_bounds = array<i64: 8, 32>}, {pipeline_mode = #tpu.pipeline_mode<synchronous>, transform_indices = @transform_1, window_bounds = array<i64: 32, 32>}, {pipeline_mode = #tpu.pipeline_mode<synchronous>, transform_indices = @transform_2, window_bounds = array<i64: 1, 32>}, {pipeline_mode = #tpu.pipeline_mode<synchronous>, transform_indices = @transform_3, window_bounds = array<i64: 32, 32>}, {pipeline_mode = #tpu.pipeline_mode<synchronous>, transform_indices = @transform_4, window_bounds = array<i64: 1, 32>}, {transform_indices = @transform_5, window_bounds = array<i64: 8, 32>}]} {
    %c0_i32 = arith.constant 0 : i32
    %0 = arith.cmpi eq, %arg1, %c0_i32 : i32
    %1 = arith.extui %0 : i1 to i32
    %c0_i32_0 = arith.constant 0 : i32
    %2 = arith.cmpi ne, %1, %c0_i32_0 : i32
    scf.if %2 {
      %c0_8 = arith.constant 0 : index
      %c0_9 = arith.constant 0 : index
      %10 = vector.load %arg2[%c0_8, %c0_9] : memref<8x32xf32, #tpu.memory_space<vmem>>, vector<8x32xf32>
      %11 = arith.truncf %10 : vector<8x32xf32> to vector<8x32xbf16>
      %c0_10 = arith.constant 0 : index
      %c0_11 = arith.constant 0 : index
      %12 = vector.load %arg3[%c0_10, %c0_11] : memref<32x32xbf16, #tpu.memory_space<vmem>>, vector<32x32xbf16>
      %cst_12 = arith.constant dense<0.000000e+00> : vector<8x32xf32>
      %13 = tpu.matmul %11, %12, %cst_12 {dimension_numbers = #tpu.dot_dimension_numbers<[1], [0], [0], [1], [0, 0, 1, 1], [], []>} : vector<8x32xbf16>, vector<32x32xbf16>, vector<8x32xf32> -> vector<8x32xf32>
      %c0_13 = arith.constant 0 : index
      %c0_14 = arith.constant 0 : index
      %14 = vector.load %arg4[%c0_13, %c0_14] : memref<1x32xf32, #tpu.memory_space<vmem>>, vector<1x32xf32>
      %15 = vector.broadcast %14 : vector<1x32xf32> to vector<8x32xf32>
      %16 = arith.addf %13, %15 : vector<8x32xf32>
      %cst_15 = arith.constant 0.000000e+00 : f32
      %17 = vector.broadcast %cst_15 : f32 to vector<8x32xf32>
      %18 = arith.maximumf %16, %17 : vector<8x32xf32>
      %19 = arith.truncf %18 : vector<8x32xf32> to vector<8x32xbf16>
      %c0_16 = arith.constant 0 : index
      %c0_17 = arith.constant 0 : index
      %20 = vector.load %arg8[%c0_16, %c0_17] : memref<8x32xbf16, #tpu.memory_space<vmem>>, vector<8x32xbf16>
      tpu.vector_store %arg8[%c0_16, %c0_17], %19 {strides = array<i32>} : memref<8x32xbf16, #tpu.memory_space<vmem>>, vector<8x32xbf16>,
    } else {
    }
    %c0 = arith.constant 0 : index
    %c0_1 = arith.constant 0 : index
    %3 = vector.load %arg8[%c0, %c0_1] : memref<8x32xbf16, #tpu.memory_space<vmem>>, vector<8x32xbf16>
    %c0_2 = arith.constant 0 : index
    %c0_3 = arith.constant 0 : index
    %4 = vector.load %arg5[%c0_2, %c0_3] : memref<32x32xbf16, #tpu.memory_space<vmem>>, vector<32x32xbf16>
    %cst = arith.constant dense<0.000000e+00> : vector<8x32xf32>
    %5 = tpu.matmul %3, %4, %cst {dimension_numbers = #tpu.dot_dimension_numbers<[1], [0], [0], [1], [0, 0, 1, 1], [], []>} : vector<8x32xbf16>, vector<32x32xbf16>, vector<8x32xf32> -> vector<8x32xf32>
    %c0_4 = arith.constant 0 : index
    %c0_5 = arith.constant 0 : index
    %6 = vector.load %arg6[%c0_4, %c0_5] : memref<1x32xf32, #tpu.memory_space<vmem>>, vector<1x32xf32>
    %7 = vector.broadcast %6 : vector<1x32xf32> to vector<8x32xf32>
    %8 = arith.addf %5, %7 : vector<8x32xf32>
    %c0_6 = arith.constant 0 : index
    %c0_7 = arith.constant 0 : index
    %9 = vector.load %arg7[%c0_6, %c0_7] : memref<8x32xf32, #tpu.memory_space<vmem>>, vector<8x32xf32>
    tpu.vector_store %arg7[%c0_6, %c0_7], %8 {strides = array<i32>} : memref<8x32xf32, #tpu.memory_space<vmem>>, vector<8x32xf32>,
    return
  }
  func.func @transform_0(%arg0: i32, %arg1: i32) -> (i32, i32) {
    %c0_i32 = arith.constant 0 : i32
    %c0_i32_0 = arith.constant 0 : i32
    return %arg0, %c0_i32 : i32, i32
  }
  func.func @transform_1(%arg0: i32, %arg1: i32) -> (i32, i32) {
    %c0_i32 = arith.constant 0 : i32
    %c0_i32_0 = arith.constant 0 : i32
    %c0_i32_1 = arith.constant 0 : i32
    return %c0_i32, %c0_i32_0 : i32, i32
  }
  func.func @transform_2(%arg0: i32, %arg1: i32) -> (i32, i32) {
    %c0_i32 = arith.constant 0 : i32
    %c0_i32_0 = arith.constant 0 : i32
    %c0_i32_1 = arith.constant 0 : i32
    return %c0_i32, %c0_i32_0 : i32, i32
  }
  func.func @transform_3(%arg0: i32, %arg1: i32) -> (i32, i32) {
    %c0_i32 = arith.constant 0 : i32
    %c0_i32_0 = arith.constant 0 : i32
    return %c0_i32, %arg1 : i32, i32
  }
  func.func @transform_4(%arg0: i32, %arg1: i32) -> (i32, i32) {
    %c0_i32 = arith.constant 0 : i32
    %c0_i32_0 = arith.constant 0 : i32
    return %c0_i32, %arg1 : i32, i32
  }
  func.func @transform_5(%arg0: i32, %arg1: i32) -> (i32, i32) {
    %c0_i32 = arith.constant 0 : i32
    return %arg0, %arg1 : i32, i32
  }
}

module attributes {stable_mosaic.version = 11 : i64} {
  func.func @_mlp_kernel(%arg0: i32, %arg1: i32, %arg2: memref<8x32xf32, #tpu.memory_space<vmem>>, %arg3: memref<32x32xbf16, #tpu.memory_space<vmem>>, %arg4: memref<1x32xf32, #tpu.memory_space<vmem>>, %arg5: memref<32x32xbf16, #tpu.memory_space<vmem>>, %arg6: memref<1x32xf32, #tpu.memory_space<vmem>>, %arg7: memref<8x32xf32, #tpu.memory_space<vmem>>, %arg8: memref<8x32xbf16, #tpu.memory_space<vmem>>) attributes {dimension_semantics = [#tpu.dimension_semantics<parallel>, #tpu.dimension_semantics<arbitrary>], iteration_bounds = array<i64: 2, 1>, scalar_prefetch = 0 : i64, scratch_operands = 1 : i64, tpu.core_type = #tpu.core_type<tc>, window_params = [{transform_indices = @transform_0, window_bounds = array<i64: 8, 32>}, {pipeline_mode = #tpu.pipeline_mode<synchronous>, transform_indices = @transform_1, window_bounds = array<i64: 32, 32>}, {pipeline_mode = #tpu.pipeline_mode<synchronous>, transform_indices = @transform_2, window_bounds = array<i64: 1, 32>}, {transform_indices = @transform_3, window_bounds = array<i64: 32, 32>}, {transform_indices = @transform_4, window_bounds = array<i64: 1, 32>}, {transform_indices = @transform_5, window_bounds = array<i64: 8, 32>}]} {
    %c0_i32 = arith.constant 0 : i32
    %0 = arith.cmpi eq, %arg1, %c0_i32 : i32
    %1 = arith.extui %0 : i1 to i32
    %c0_i32_0 = arith.constant 0 : i32
    %2 = arith.cmpi ne, %1, %c0_i32_0 : i32
    scf.if %2 {
      %c0_8 = arith.constant 0 : index
      %c0_9 = arith.constant 0 : index
      %10 = vector.load %arg2[%c0_8, %c0_9] : memref<8x32xf32, #tpu.memory_space<vmem>>, vector<8x32xf32>
      %11 = arith.truncf %10 : vector<8x32xf32> to vector<8x32xbf16>
      %c0_10 = arith.constant 0 : index
      %c0_11 = arith.constant 0 : index
      %12 = vector.load %arg3[%c0_10, %c0_11] : memref<32x32xbf16, #tpu.memory_space<vmem>>, vector<32x32xbf16>
      %cst_12 = arith.constant dense<0.000000e+00> : vector<8x32xf32>
      %13 = tpu.matmul %11, %12, %cst_12 {dimension_numbers = #tpu.dot_dimension_numbers<[1], [0], [0], [1], [0, 0, 1, 1], [], []>} : vector<8x32xbf16>, vector<32x32xbf16>, vector<8x32xf32> -> vector<8x32xf32>
      %c0_13 = arith.constant 0 : index
      %c0_14 = arith.constant 0 : index
      %14 = vector.load %arg4[%c0_13, %c0_14] : memref<1x32xf32, #tpu.memory_space<vmem>>, vector<1x32xf32>
      %15 = vector.broadcast %14 : vector<1x32xf32> to vector<8x32xf32>
      %16 = arith.addf %13, %15 : vector<8x32xf32>
      %cst_15 = arith.constant 0.000000e+00 : f32
      %17 = vector.broadcast %cst_15 : f32 to vector<8x32xf32>
      %18 = arith.maximumf %16, %17 : vector<8x32xf32>
      %19 = arith.truncf %18 : vector<8x32xf32> to vector<8x32xbf16>
      %c0_16 = arith.constant 0 : index
      %c0_17 = arith.constant 0 : index
      %20 = vector.load %arg8[%c0_16, %c0_17] : memref<8x32xbf16, #tpu.memory_space<vmem>>, vector<8x32xbf16>
      tpu.vector_store %arg8[%c0_16, %c0_17], %19 {strides = array<i32>} : memref<8x32xbf16, #tpu.memory_space<vmem>>, vector<8x32xbf16>,
    } else {
    }
    %c0 = arith.constant 0 : index
    %c0_1 = arith.constant 0 : index
    %3 = vector.load %arg8[%c0, %c0_1] : memref<8x32xbf16, #tpu.memory_space<vmem>>, vector<8x32xbf16>
    %c0_2 = arith.constant 0 : index
    %c0_3 = arith.constant 0 : index
    %4 = vector.load %arg5[%c0_2, %c0_3] : memref<32x32xbf16, #tpu.memory_space<vmem>>, vector<32x32xbf16>
    %cst = arith.constant dense<0.000000e+00> : vector<8x32xf32>
    %5 = tpu.matmul %3, %4, %cst {dimension_numbers = #tpu.dot_dimension_numbers<[1], [0], [0], [1], [0, 0, 1, 1], [], []>} : vector<8x32xbf16>, vector<32x32xbf16>, vector<8x32xf32> -> vector<8x32xf32>
    %c0_4 = arith.constant 0 : index
    %c0_5 = arith.constant 0 : index
    %6 = vector.load %arg6[%c0_4, %c0_5] : memref<1x32xf32, #tpu.memory_space<vmem>>, vector<1x32xf32>
    %7 = vector.broadcast %6 : vector<1x32xf32> to vector<8x32xf32>
    %8 = arith.addf %5, %7 : vector<8x32xf32>
    %c0_6 = arith.constant 0 : index
    %c0_7 = arith.constant 0 : index
    %9 = vector.load %arg7[%c0_6, %c0_7] : memref<8x32xf32, #tpu.memory_space<vmem>>, vector<8x32xf32>
    tpu.vector_store %arg7[%c0_6, %c0_7], %8 {strides = array<i32>} : memref<8x32xf32, #tpu.memory_space<vmem>>, vector<8x32xf32>,
    return
  }
  func.func @transform_0(%arg0: i32, %arg1: i32) -> (i32, i32) {
    %c0_i32 = arith.constant 0 : i32
    %c0_i32_0 = arith.constant 0 : i32
    return %arg0, %c0_i32 : i32, i32
  }
  func.func @transform_1(%arg0: i32, %arg1: i32) -> (i32, i32) {
    %c0_i32 = arith.constant 0 : i32
    %c0_i32_0 = arith.constant 0 : i32
    %c0_i32_1 = arith.constant 0 : i32
    return %c0_i32, %c0_i32_0 : i32, i32
  }
  func.func @transform_2(%arg0: i32, %arg1: i32) -> (i32, i32) {
    %c0_i32 = arith.constant 0 : i32
    %c0_i32_0 = arith.constant 0 : i32
    %c0_i32_1 = arith.constant 0 : i32
    return %c0_i32, %c0_i32_0 : i32, i32
  }
  func.func @transform_3(%arg0: i32, %arg1: i32) -> (i32, i32) {
    %c0_i32 = arith.constant 0 : i32
    %c0_i32_0 = arith.constant 0 : i32
    return %c0_i32, %arg1 : i32, i32
  }
  func.func @transform_4(%arg0: i32, %arg1: i32) -> (i32, i32) {
    %c0_i32 = arith.constant 0 : i32
    %c0_i32_0 = arith.constant 0 : i32
    return %c0_i32, %arg1 : i32, i32
  }
  func.func @transform_5(%arg0: i32, %arg1: i32) -> (i32, i32) {
    %c0_i32 = arith.constant 0 : i32
    return %arg0, %arg1 : i32, i32
  }
}

</mosaic_0001>

<llo_original>
// kernel: tpu_custom_call.1
$region0: #{tpu_custom_call.1}
  #allocation0 [shape = 'u32[]', space=smem, size = 0x4, offset = 0x4, fixed_abs, tag = 'smem constant byte address 0x4 - core index']
  #allocation1 [shape = 'u32[72,128]{1,0:T(1,128)}', space=vmem, size = 0x9000, scoped, tag = 'internal scratch']
  #allocation2 [shape = 'bf16[8,32]{1,0:T(8,128)(2,1)}', space=vmem, size = 0x800, scoped, tag = 'scratch operand']
  %s0 = inlined_call_operand.hbm [shape: f32[16,32], index: 0, kind: input, shape index: {}]
  %s1 = inlined_call_operand.hbm [shape: bf16[32,32], index: 1, kind: input, shape index: {}]
  %s2 = inlined_call_operand.vmem [shape: f32[1,32], index: 2, kind: input, shape index: {}]
  %s3 = inlined_call_operand.hbm [shape: bf16[32,32], index: 3, kind: input, shape index: {}]
  %s4 = inlined_call_operand.vmem [shape: f32[1,32], index: 4, kind: input, shape index: {}]
  %s5 = inlined_call_operand.hbm [shape: f32[16,32], index: 5, kind: output, shape index: {}]
  %s6 = sld [smem:[#allocation0]]
  $region69: #{tpu_custom_call.1} parent=0
    _
  %s8 = ssub.s32 1, %s6
  %s9 = scalar_select 0, %s8, %s6
  $region1: #{tpu_custom_call.1} parent=0
    #allocation3 [shape = 'u8[8192]{0}', space=vmem, size = 0x2000, scoped, tag = 'input window, operand 0']
    #allocation4 [shape = 's32[2]{0}', space=sflag, size = 0x8, scoped, tag = 'scoped memory for tpu_custom_call.1']
    #allocation5 [shape = 's32[2]{0}', space=sflag, size = 0x8, scoped, tag = 'scoped memory for tpu_custom_call.1']
    #allocation6 [shape = 'u8[8192]{0}', space=vmem, size = 0x2000, scoped, tag = 'input window, operand 1, single buffered']
    #allocation7 [shape = 's32[1]{0}', space=sflag, size = 0x4, scoped, tag = 'scoped memory for tpu_custom_call.1']
    #allocation8 [shape = 'u8[8192]{0}', space=vmem, size = 0x2000, scoped, tag = 'input window, operand 3, single buffered']
    #allocation9 [shape = 'u8[8192]{0}', space=vmem, size = 0x2000, scoped, tag = 'output window, operand 0']
    %10 = vsyncpa [#allocation4], 0
    %s11 = scalar_lea.sflag [#allocation4], 1
    %12 = vsyncpa %s11, 0
    %13 = vsyncpa [#allocation7], 0
    %14 = vsyncpa [#allocation5], 0
    %s15 = scalar_lea.sflag [#allocation5], 1
    %16 = vsyncpa %s15, 0
    loop: start=0, step=1, limit=4
    $region2: #{tpu_custom_call.1} parent=1 // loop_pre_header
      _
    $region3: #{tpu_custom_call.1} parent=1 // loop_header
      %s18 = sphi 0, %s22
      %p19 = scmp.ge.s32.totalorder %s18, 4
      %s25 = sphi 0, %s37
      %s26 = sphi 0, %s33
      %s27 = sphi 0, %s25
      %s28 = sphi 0, %s26
      %s29 = sphi 0, %s27
      %s30 = sphi 0, %s28
      %s40 = sphi 0, %s42
      %s43 = sphi 0, %s40
      %s44 = sphi 0, %s43
      %s60 = sphi 0, %s44
      %s64 = sphi 0, %s64
      %s66 = sphi 0, %s64
      %s67 = sphi 0, %s66
      %s81 = sphi 0, %s67
      %s85 = sphi 0, %s85
      %s87 = sphi 0, %s85
      %s88 = sphi 0, %s87
      %s102 = sphi 0, %s88
      %s108 = sphi 0, %s110
      %s111 = sphi 0, %s108
      %s112 = sphi 0, %s111
      %s128 = sphi 0, %s112
      %s134 = sphi 0, %s136
      %s137 = sphi 0, %s134
      %s138 = sphi 0, %s137
      %s154 = sphi 0, %s138
      %s162 = sphi 0, %s164
      %s165 = sphi 0, %s162
      %s166 = sphi 0, %s165
      %s182 = sphi 0, %s166
    $region4: #{tpu_custom_call.1} parent=1 // loop_header_branch
      %21 = sbr.rel (%p19) target = $region8
    $region5: #{tpu_custom_call.1} parent=1 // loop_body
      %s23 = ssub.s32 %s18, 1
      %s24 = ssub.s32 %s18, 2
      %s31 = sadd.s32 1, %s26
      %p32 = scmp.ge.s32.totalorder %s31, 1
      %s33 = scalar_select %p32, 0, %s31
      %s34 = sadd.s32 1, %s25
      %s35 = scalar_select %p32, %s34, %s25
      %p36 = scmp.ge.s32.totalorder %s35, 2
      %s37 = scalar_select %p36, 0, %s35
      %s38 = ssub.s32 %s25, %s37
      %p39 = scmp.eq.s32.totalorder %s38, 0
      %s41 = sadd.s32 %s40, 1
      %s42 = scalar_select %p39, %s40, %s41
      %p45 = pneg %p39
      %p46 = scmp.eq.s32.totalorder %s18, 1
      %p47 = por %p45, %p46
      %p48 = scmp.ne.s32.totalorder %s40, %s43
      %p49 = scmp.eq.s32.totalorder %s18, 0
      %p50 = por %p48, %p49
      %p51 = scmp.ne.s32.totalorder %s40, %s43
      %p52 = scmp.eq.s32.totalorder %s23, 1
      %p53 = por %p51, %p52
      %p54 = scmp.ne.s32.totalorder %s43, %s44
      %p55 = scmp.eq.s32.totalorder %s23, 0
      %p56 = por %p54, %p55
      %p57 = scmp.ne.s32.totalorder %s43, %s44
      %p58 = scmp.eq.s32.totalorder %s24, 1
      %p59 = por %p57, %p58
      %p61 = scmp.ne.s32.totalorder %s44, %s60
      %p62 = scmp.eq.s32.totalorder %s24, 0
      %p63 = por %p61, %p62
      %s65 = sadd.s32 %s64, 1
      %p68 = scmp.eq.s32.totalorder %s18, 1
      %p69 = scmp.ne.s32.totalorder %s64, %s66
      %p70 = scmp.eq.s32.totalorder %s18, 0
      %p71 = por %p69, %p70
      %p72 = scmp.ne.s32.totalorder %s64, %s66
      %p73 = scmp.eq.s32.totalorder %s23, 1
      %p74 = por %p72, %p73
      %p75 = scmp.ne.s32.totalorder %s66, %s67
      %p76 = scmp.eq.s32.totalorder %s23, 0
      %p77 = por %p75, %p76
      %p78 = scmp.ne.s32.totalorder %s66, %s67
      %p79 = scmp.eq.s32.totalorder %s24, 1
      %p80 = por %p78, %p79
      %p82 = scmp.ne.s32.totalorder %s67, %s81
      %p83 = scmp.eq.s32.totalorder %s24, 0
      %p84 = por %p82, %p83
      %s86 = sadd.s32 %s85, 1
      %p89 = scmp.eq.s32.totalorder %s18, 1
      %p90 = scmp.ne.s32.totalorder %s85, %s87
      %p91 = scmp.eq.s32.totalorder %s18, 0
      %p92 = por %p90, %p91
      %p93 = scmp.ne.s32.totalorder %s85, %s87
      %p94 = scmp.eq.s32.totalorder %s23, 1
      %p95 = por %p93, %p94
      %p96 = scmp.ne.s32.totalorder %s87, %s88
      %p97 = scmp.eq.s32.totalorder %s23, 0
      %p98 = por %p96, %p97
      %p99 = scmp.ne.s32.totalorder %s87, %s88
      %p100 = scmp.eq.s32.totalorder %s24, 1
      %p101 = por %p99, %p100
      %p103 = scmp.ne.s32.totalorder %s88, %s102
      %p104 = scmp.eq.s32.totalorder %s24, 0
      %p105 = por %p103, %p104
      %s106 = ssub.s32 %s26, %s33
      %p107 = scmp.eq.s32.totalorder %s106, 0
      %s109 = sadd.s32 %s108, 1
      %s110 = scalar_select %p107, %s108, %s109
      %p113 = pneg %p107
      %p114 = scmp.eq.s32.totalorder %s18, 1
      %p115 = por %p113, %p114
      %p116 = scmp.ne.s32.totalorder %s108, %s111
      %p117 = scmp.eq.s32.totalorder %s18, 0
      %p118 = por %p116, %p117
      %p119 = scmp.ne.s32.totalorder %s108, %s111
      %p120 = scmp.eq.s32.totalorder %s23, 1
      %p121 = por %p119, %p120
      %p122 = scmp.ne.s32.totalorder %s111, %s112
      %p123 = scmp.eq.s32.totalorder %s23, 0
      %p124 = por %p122, %p123
      %p125 = scmp.ne.s32.totalorder %s111, %s112
      %p126 = scmp.eq.s32.totalorder %s24, 1
      %p127 = por %p125, %p126
      %p129 = scmp.ne.s32.totalorder %s112, %s128
      %p130 = scmp.eq.s32.totalorder %s24, 0
      %p131 = por %p129, %p130
      %s132 = ssub.s32 %s26, %s33
      %p133 = scmp.eq.s32.totalorder %s132, 0
      %s135 = sadd.s32 %s134, 1
      %s136 = scalar_select %p133, %s134, %s135
      %p139 = pneg %p133
      %p140 = scmp.eq.s32.totalorder %s18, 1
      %p141 = por %p139, %p140
      %p142 = scmp.ne.s32.totalorder %s134, %s137
      %p143 = scmp.eq.s32.totalorder %s18, 0
      %p144 = por %p142, %p143
      %p145 = scmp.ne.s32.totalorder %s134, %s137
      %p146 = scmp.eq.s32.totalorder %s23, 1
      %p147 = por %p145, %p146
      %p148 = scmp.ne.s32.totalorder %s137, %s138
      %p149 = scmp.eq.s32.totalorder %s23, 0
      %p150 = por %p148, %p149
      %p151 = scmp.ne.s32.totalorder %s137, %s138
      %p152 = scmp.eq.s32.totalorder %s24, 1
      %p153 = por %p151, %p152
      %p155 = scmp.ne.s32.totalorder %s138, %s154
      %p156 = scmp.eq.s32.totalorder %s24, 0
      %p157 = por %p155, %p156
      %s158 = ssub.s32 %s25, %s37
      %s159 = ssub.s32 %s26, %s33
      %s160 = sor.u32 %s158, %s159
      %p161 = scmp.eq.s32.totalorder %s160, 0
      %s163 = sadd.s32 %s162, 1
      %s164 = scalar_select %p161, %s162, %s163
      %p167 = pneg %p161
      %p168 = scmp.eq.s32.totalorder %s18, 1
      %p169 = por %p167, %p168
      %p170 = scmp.ne.s32.totalorder %s162, %s165
      %p171 = scmp.eq.s32.totalorder %s18, 0
      %p172 = por %p170, %p171
      %p173 = scmp.ne.s32.totalorder %s162, %s165
      %p174 = scmp.eq.s32.totalorder %s23, 1
      %p175 = por %p173, %p174
      %p176 = scmp.ne.s32.totalorder %s165, %s166
      %p177 = scmp.eq.s32.totalorder %s23, 0
      %p178 = por %p176, %p177
      %p179 = scmp.ne.s32.totalorder %s165, %s166
      %p180 = scmp.eq.s32.totalorder %s24, 1
      %p181 = por %p179, %p180
      %p183 = scmp.ne.s32.totalorder %s166, %s182
      %p184 = scmp.eq.s32.totalorder %s24, 0
      %p185 = por %p183, %p184
      %p186 = scmp.le.s32.totalorder 1, %s18
      %p187 = scmp.lt.s32.totalorder %s18, 3
      %p188 = pnand %p186, %p187
      %p189 = pneg %p188
      // Predicated region
      $region9: #{tpu_custom_call.1} parent=5 // pred_check
        _
      $region10: #{tpu_custom_call.1} parent=5 // pred_check_branch
        %191 = sbr.rel (%p188) target = $region12
      $region11: #{tpu_custom_call.1} parent=5 // pred_region
        %s192 = ssub.s32 %s18, 1
        // Predicated region
        $region13: #{tpu_custom_call.1} parent=11 // pred_check
          %p193 = pneg %p77
        $region14: #{tpu_custom_call.1} parent=11 // pred_check_branch
          %195 = sbr.rel (%p193) target = $region16
        $region15: #{tpu_custom_call.1} parent=11 // pred_region
          %197 = vsyncadd [#allocation7], 0
          %s198 = sshll.u32 %s1, 4
          %s199 = int_to_ptr.hbm [resolvable:$true] %s198
          %s200 = sshll.u32 [#allocation6], 4
          %s201 = int_to_ptr.vmem [resolvable:$true] %s200
          %206 = dma.hbm_to_vmem [thread:$0]  %s199, 256, %s201, [#allocation7], 64, 64, 4
        $region16: #{tpu_custom_call.1} parent=11 // pred_fallthru
          _
        // Predicated region
        $region17: #{tpu_custom_call.1} parent=11 // pred_check
          %p207 = pneg %p98
        $region18: #{tpu_custom_call.1} parent=11 // pred_check_branch
          %209 = sbr.rel (%p207) target = $region20
        $region19: #{tpu_custom_call.1} parent=11 // pred_region
          _
        $region20: #{tpu_custom_call.1} parent=11 // pred_fallthru
          _
        // Predicated region
        $region21: #{tpu_custom_call.1} parent=11 // pred_check
          %p210 = pneg %p124
        $region22: #{tpu_custom_call.1} parent=11 // pred_check_branch
          %212 = sbr.rel (%p210) target = $region24
        $region23: #{tpu_custom_call.1} parent=11 // pred_region
          %214 = vsyncadd [#allocation7], 0
          %s215 = smul.addr %s28, 4
          %s216 = scalar_lea.hbm %s3, %s215
          %s217 = sshll.u32 %s216, 4
          %s218 = int_to_ptr.hbm [resolvable:$true] %s217
          %s219 = sshll.u32 [#allocation8], 4
          %s220 = int_to_ptr.vmem [resolvable:$true] %s219
          %225 = dma.hbm_to_vmem [thread:$0]  %s218, 256, %s220, [#allocation7], 64, 64, 4
        $region24: #{tpu_custom_call.1} parent=11 // pred_fallthru
          _
        // Predicated region
        $region25: #{tpu_custom_call.1} parent=11 // pred_check
          %p226 = pneg %p150
        $region26: #{tpu_custom_call.1} parent=11 // pred_check_branch
          %228 = sbr.rel (%p226) target = $region28
        $region27: #{tpu_custom_call.1} parent=11 // pred_region
          %p229 = scmp.lt.s32.totalorder %s28, 0
          %s230 = scalar_select %p229, %s28, 0
          %s231 = scalar_lea.vmem %s4, %s230
        $region28: #{tpu_custom_call.1} parent=11 // pred_fallthru
          _
      $region12: #{tpu_custom_call.1} parent=5 // pred_fallthru
        _
      %p232 = scmp.lt.s32.totalorder %s18, 2
      // Predicated region
      $region29: #{tpu_custom_call.1} parent=5 // pred_check
        %p233 = pneg %p232
      $region30: #{tpu_custom_call.1} parent=5 // pred_check_branch
        %235 = sbr.rel (%p233) target = $region32
      $region31: #{tpu_custom_call.1} parent=5 // pred_region
        // Predicated region
        $region33: #{tpu_custom_call.1} parent=31 // pred_check
          %p236 = pneg %p50
        $region34: #{tpu_custom_call.1} parent=31 // pred_check_branch
          %238 = sbr.rel (%p236) target = $region36
        $region35: #{tpu_custom_call.1} parent=31 // pred_region
          %s239 = sand.u32 %s40, 1
          %s240 = scalar_lea.sflag [#allocation4], %s239
          %s241 = sand.u32 %s40, 1
          %s242 = smul.addr %s241, 8
          %s243 = scalar_lea.vmem [#allocation3], %s242
          %245 = vsyncadd %s240, 0
          %s246 = smul.addr %s25, 8
          %s247 = scalar_lea.hbm %s0, %s246
          %s249 = sshll.u32 %s247, 4
          %s250 = int_to_ptr.hbm [resolvable:$true] %s249
          %s251 = sshll.u32 %s243, 4
          %s252 = int_to_ptr.vmem [resolvable:$true] %s251
          %254 = dma.hbm_to_vmem [thread:$0]  %s250, 128, %s252, %s240
        $region36: #{tpu_custom_call.1} parent=31 // pred_fallthru
          _
      $region32: #{tpu_custom_call.1} parent=5 // pred_fallthru
        _
      %p255 = scmp.le.s32.totalorder 1, %s18
      %p256 = scmp.lt.s32.totalorder %s18, 3
      %p257 = pnand %p255, %p256
      %p258 = pneg %p257
      // Predicated region
      $region37: #{tpu_custom_call.1} parent=5 // pred_check
        _
      $region38: #{tpu_custom_call.1} parent=5 // pred_check_branch
        %260 = sbr.rel (%p257) target = $region40
      $region39: #{tpu_custom_call.1} parent=5 // pred_region
        %s261 = ssub.s32 %s18, 1
        %s262 = sand.u32 %s43, 1
        %s263 = scalar_lea.sflag [#allocation4], %s262
        %s264 = sand.u32 %s43, 1
        %s265 = smul.addr %s264, 8
        %s266 = scalar_lea.vmem [#allocation3], %s265
        // Predicated region
        $region41: #{tpu_custom_call.1} parent=39 // pred_check
          %p267 = pneg %p56
        $region42: #{tpu_custom_call.1} parent=39 // pred_check_branch
          %269 = sbr.rel (%p267) target = $region44
        $region43: #{tpu_custom_call.1} parent=39 // pred_region
          %271 = dma.done %s263, 128
        $region44: #{tpu_custom_call.1} parent=39 // pred_fallthru
          _
        // Predicated region
        $region45: #{tpu_custom_call.1} parent=39 // pred_check
          %p272 = pneg %p77
        $region46: #{tpu_custom_call.1} parent=39 // pred_check_branch
          %274 = sbr.rel (%p272) target = $region48
        $region47: #{tpu_custom_call.1} parent=39 // pred_region
          %276 = dma.done [#allocation7], 256
        $region48: #{tpu_custom_call.1} parent=39 // pred_fallthru
          _
        // Predicated region
        $region49: #{tpu_custom_call.1} parent=39 // pred_check
          %p277 = pneg %p124
        $region50: #{tpu_custom_call.1} parent=39 // pred_check_branch
          %279 = sbr.rel (%p277) target = $region52
        $region51: #{tpu_custom_call.1} parent=39 // pred_region
          %281 = dma.done [#allocation7], 256
        $region52: #{tpu_custom_call.1} parent=39 // pred_fallthru
          _
        %s282 = sand.u32 %s43, 1
        %s283 = scalar_lea.sflag [#allocation4], %s282
        %s284 = sand.u32 %s43, 1
        %s285 = smul.addr %s284, 8
        %s286 = scalar_lea.vmem [#allocation3], %s285
        %p287 = pneg %p56
        %p288 = pneg %p53
        %p289 = pneg %p77
        %p290 = pneg %p74
        %p291 = pneg %p98
        %p292 = pneg %p95
        %p293 = pneg %p124
        %p294 = pneg %p121
        %p295 = scmp.lt.s32.totalorder %s28, 0
        %s296 = scalar_select %p295, %s28, 0
        %s297 = scalar_lea.vmem %s4, %s296
        %p298 = pneg %p150
        %p299 = pneg %p147
        %p300 = pneg %p178
        %p301 = pneg %p175
        %s302 = sand.u32 %s165, 1
        %s303 = scalar_lea.sflag [#allocation5], %s302
        %s304 = sand.u32 %s165, 1
        %s305 = smul.addr %s304, 8
        %s306 = scalar_lea.vmem [#allocation9], %s305
        %p307 = scmp.lt.s32.totalorder %s28, 0
        %s308 = scalar_select %p307, %s28, 0
        %s309 = scalar_lea.vmem %s4, %s308
        %p311 = scmp.eq.s32.totalorder %s28, 0
        // Predicated region
        $region53: #{tpu_custom_call.1} parent=39 // pred_check
          %p312 = pneg %p311
        $region54: #{tpu_custom_call.1} parent=39 // pred_check_branch
          %314 = sbr.rel (%p312) target = $region56
        $region55: #{tpu_custom_call.1} parent=39 // pred_region
          %v315 = vld [vmem:[%s266] sm:$0xff]
          %v316 = vpack.c.bf16 %v315, %v315
          %v317 = vld [vmem:[#allocation6] sm:$0xf]
          %v318 = vld [vmem:[#allocation6 + $0x4] sm:$0xf]
          %v319 = vld [vmem:[#allocation6 + $0x8] sm:$0xf]
          %v320 = vld [vmem:[#allocation6 + $0xc] sm:$0xf]
          %v321 = vld [vmem:[%s2] sm:$0x1]
          %v323 = vperm.slane %v321, 0
          %v329 = vunpack.c.l.b16 %v317
          %v330 = vunpack.c.l.b16 %v318
          %v331 = vunpack.c.l.b16 %v319
          %v332 = vunpack.c.l.b16 %v320
          %v333 = vpack.c.b16 %v330, %v329
          %v334 = vpack.c.b16 %v332, %v331
          %vm337 = vcmask 261120
          %v339 = vsel %vm337, %v316, 0
          %341 = vmatpush.bf16.msra.mxu0 0
          %342 = vmatpush.bf16.msra.mxu0 0
          %343 = vmatpush.bf16.msra.mxu0 0
          %344 = vmatpush.bf16.msra.mxu0 0
          %345 = vmatpush.bf16.msra.mxu0 0
          %346 = vmatpush.bf16.msra.mxu0 0
          %347 = vmatpush.bf16.msra.mxu0 %v334
          %348 = vmatpush.bf16.msra.mxu0 %v333
          %349 = vmatmul.bf16.gmra.mxu0 %v339
          %v350 = vpop.f32.mrf.mxu0
          %v351 = vadd.f32 %v323, %v350
          %v352 = vpop.f32.mrf.mxu0
          %353 = vdwg.mxu0
          %v354 = vmax.f32 %v351, 0.0
          %v355 = vpack.c.bf16 %v354, %v354
          %vm356 = vcmask 257024
          %357 = vst.msk [vmem:[#allocation2] sm:$0xf] %vm356, %v355
        $region56: #{tpu_custom_call.1} parent=39 // pred_fallthru
          _
        %v358 = vld [vmem:[#allocation2] sm:$0xf]
        %v359 = vld [vmem:[#allocation8] sm:$0xf]
        %v360 = vld [vmem:[#allocation8 + $0x4] sm:$0xf]
        %v361 = vld [vmem:[#allocation8 + $0x8] sm:$0xf]
        %v362 = vld [vmem:[#allocation8 + $0xc] sm:$0xf]
        %v363 = vld [vmem:[%s309] sm:$0x1]
        %v365 = vperm.slane %v363, 0
        %v371 = vunpack.c.l.b16 %v359
        %v372 = vunpack.c.l.b16 %v360
        %v373 = vunpack.c.l.b16 %v361
        %v374 = vunpack.c.l.b16 %v362
        %v375 = vpack.c.b16 %v372, %v371
        %v376 = vpack.c.b16 %v374, %v373
        %vm379 = vcmask 261120
        %v381 = vsel %vm379, %v358, 0
        %383 = vmatpush.bf16.msra.mxu0 0
        %384 = vmatpush.bf16.msra.mxu0 0
        %385 = vmatpush.bf16.msra.mxu0 0
        %386 = vmatpush.bf16.msra.mxu0 0
        %387 = vmatpush.bf16.msra.mxu0 0
        %388 = vmatpush.bf16.msra.mxu0 0
        %389 = vmatpush.bf16.msra.mxu0 %v376
        %390 = vmatpush.bf16.msra.mxu0 %v375
        %391 = vmatmul.bf16.gmra.mxu0 %v381
        %v392 = vpop.f32.mrf.mxu0
        %v393 = vadd.f32 %v365, %v392
        %v394 = vpop.f32.mrf.mxu0
        %395 = vdwg.mxu0
        %396 = vst.msk [vmem:[%s306] sm:$0xff] %vm379, %v393
        %s397 = sand.u32 %s165, 1
        %s398 = scalar_lea.sflag [#allocation5], %s397
        %s399 = sand.u32 %s165, 1
        %s400 = smul.addr %s399, 8
        %s401 = scalar_lea.vmem [#allocation9], %s400
        // Predicated region
        $region57: #{tpu_custom_call.1} parent=39 // pred_check
          %p402 = pneg %p175
        $region58: #{tpu_custom_call.1} parent=39 // pred_check_branch
          %404 = sbr.rel (%p402) target = $region60
        $region59: #{tpu_custom_call.1} parent=39 // pred_region
          %406 = vsyncadd %s398, 0
          %s407 = sadd.s32 %s28, %s27
          %s408 = smul.addr %s407, 8
          %s409 = scalar_lea.hbm %s5, %s408
          %s411 = sshll.u32 %s401, 4
          %s412 = int_to_ptr.vmem [resolvable:$true] %s411
          %s413 = sshll.u32 %s409, 4
          %s414 = int_to_ptr.hbm [resolvable:$true] %s413
          %416 = dma.vmem_to_hbm [thread:$0]  %s412, 128, %s414, %s398
        $region60: #{tpu_custom_call.1} parent=39 // pred_fallthru
          _
      $region40: #{tpu_custom_call.1} parent=5 // pred_fallthru
        _
      %p417 = scmp.le.s32.totalorder 2, %s18
      // Predicated region
      $region61: #{tpu_custom_call.1} parent=5 // pred_check
        %p418 = pneg %p417
      $region62: #{tpu_custom_call.1} parent=5 // pred_check_branch
        %420 = sbr.rel (%p418) target = $region64
      $region63: #{tpu_custom_call.1} parent=5 // pred_region
        %s421 = ssub.s32 %s18, 2
        // Predicated region
        $region65: #{tpu_custom_call.1} parent=63 // pred_check
          %p422 = pneg %p181
        $region66: #{tpu_custom_call.1} parent=63 // pred_check_branch
          %424 = sbr.rel (%p422) target = $region68
        $region67: #{tpu_custom_call.1} parent=63 // pred_region
          %s425 = sand.u32 %s166, 1
          %s426 = scalar_lea.sflag [#allocation5], %s425
          %s427 = sand.u32 %s166, 1
          %s428 = smul.addr %s427, 8
          %s429 = scalar_lea.vmem [#allocation9], %s428
          %431 = dma.done %s426, 128
        $region68: #{tpu_custom_call.1} parent=63 // pred_fallthru
          _
      $region64: #{tpu_custom_call.1} parent=5 // pred_fallthru
        _
    $region6: #{tpu_custom_call.1} parent=1 // loop_footer
      %s22 = sadd.s32 1, %s18
    $region7: #{tpu_custom_call.1} parent=1 // loop_footer_branch
      %17 = sbr.rel target = $region3
    $region8: #{tpu_custom_call.1} parent=1 // loop_exit
      _
    %432 = vsyncpa [#allocation4], 1
    %s433 = scalar_lea.sflag [#allocation4], 1
    %434 = vsyncpa %s433, 1
    %435 = vsyncpa [#allocation7], 1
    %436 = vsyncpa [#allocation5], 1
    %s437 = scalar_lea.sflag [#allocation5], 1
    %438 = vsyncpa %s437, 1

// kernel: tpu_custom_call.1
$region0: #{tpu_custom_call.1}
  #allocation0 [shape = 'u32[]', space=smem, size = 0x4, offset = 0x4, fixed_abs, tag = 'smem constant byte address 0x4 - core index']
  #allocation1 [shape = 'u32[72,128]{1,0:T(1,128)}', space=vmem, size = 0x9000, scoped, tag = 'internal scratch']
  #allocation2 [shape = 'bf16[8,32]{1,0:T(8,128)(2,1)}', space=vmem, size = 0x800, scoped, tag = 'scratch operand']
  %s0 = inlined_call_operand.hbm [shape: f32[16,32], index: 0, kind: input, shape index: {}]
  %s1 = inlined_call_operand.hbm [shape: bf16[32,32], index: 1, kind: input, shape index: {}]
  %s2 = inlined_call_operand.vmem [shape: f32[1,32], index: 2, kind: input, shape index: {}]
  %s3 = inlined_call_operand.hbm [shape: bf16[32,32], index: 3, kind: input, shape index: {}]
  %s4 = inlined_call_operand.vmem [shape: f32[1,32], index: 4, kind: input, shape index: {}]
  %s5 = inlined_call_operand.hbm [shape: f32[16,32], index: 5, kind: output, shape index: {}]
  %s6 = sld [smem:[#allocation0]]
  $region69: #{tpu_custom_call.1} parent=0
    _
  %s8 = ssub.s32 1, %s6
  %s9 = scalar_select 0, %s8, %s6
  $region1: #{tpu_custom_call.1} parent=0
    #allocation3 [shape = 'u8[8192]{0}', space=vmem, size = 0x2000, scoped, tag = 'input window, operand 0']
    #allocation4 [shape = 's32[2]{0}', space=sflag, size = 0x8, scoped, tag = 'scoped memory for tpu_custom_call.1']
    #allocation5 [shape = 's32[2]{0}', space=sflag, size = 0x8, scoped, tag = 'scoped memory for tpu_custom_call.1']
    #allocation6 [shape = 'u8[8192]{0}', space=vmem, size = 0x2000, scoped, tag = 'input window, operand 1, single buffered']
    #allocation7 [shape = 's32[1]{0}', space=sflag, size = 0x4, scoped, tag = 'scoped memory for tpu_custom_call.1']
    #allocation8 [shape = 'u8[8192]{0}', space=vmem, size = 0x2000, scoped, tag = 'input window, operand 3, single buffered']
    #allocation9 [shape = 'u8[8192]{0}', space=vmem, size = 0x2000, scoped, tag = 'output window, operand 0']
    %10 = vsyncpa [#allocation4], 0
    %s11 = scalar_lea.sflag [#allocation4], 1
    %12 = vsyncpa %s11, 0
    %13 = vsyncpa [#allocation7], 0
    %14 = vsyncpa [#allocation5], 0
    %s15 = scalar_lea.sflag [#allocation5], 1
    %16 = vsyncpa %s15, 0
    loop: start=0, step=1, limit=4
    $region2: #{tpu_custom_call.1} parent=1 // loop_pre_header
      _
    $region3: #{tpu_custom_call.1} parent=1 // loop_header
      %s18 = sphi 0, %s22
      %p19 = scmp.ge.s32.totalorder %s18, 4
      %s25 = sphi 0, %s37
      %s26 = sphi 0, %s33
      %s27 = sphi 0, %s25
      %s28 = sphi 0, %s26
      %s29 = sphi 0, %s27
      %s30 = sphi 0, %s28
      %s40 = sphi 0, %s42
      %s43 = sphi 0, %s40
      %s44 = sphi 0, %s43
      %s60 = sphi 0, %s44
      %s64 = sphi 0, %s64
      %s66 = sphi 0, %s64
      %s67 = sphi 0, %s66
      %s81 = sphi 0, %s67
      %s85 = sphi 0, %s85
      %s87 = sphi 0, %s85
      %s88 = sphi 0, %s87
      %s102 = sphi 0, %s88
      %s108 = sphi 0, %s110
      %s111 = sphi 0, %s108
      %s112 = sphi 0, %s111
      %s128 = sphi 0, %s112
      %s134 = sphi 0, %s136
      %s137 = sphi 0, %s134
      %s138 = sphi 0, %s137
      %s154 = sphi 0, %s138
      %s162 = sphi 0, %s164
      %s165 = sphi 0, %s162
      %s166 = sphi 0, %s165
      %s182 = sphi 0, %s166
    $region4: #{tpu_custom_call.1} parent=1 // loop_header_branch
      %21 = sbr.rel (%p19) target = $region8
    $region5: #{tpu_custom_call.1} parent=1 // loop_body
      %s23 = ssub.s32 %s18, 1
      %s24 = ssub.s32 %s18, 2
      %s31 = sadd.s32 1, %s26
      %p32 = scmp.ge.s32.totalorder %s31, 1
      %s33 = scalar_select %p32, 0, %s31
      %s34 = sadd.s32 1, %s25
      %s35 = scalar_select %p32, %s34, %s25
      %p36 = scmp.ge.s32.totalorder %s35, 2
      %s37 = scalar_select %p36, 0, %s35
      %s38 = ssub.s32 %s25, %s37
      %p39 = scmp.eq.s32.totalorder %s38, 0
      %s41 = sadd.s32 %s40, 1
      %s42 = scalar_select %p39, %s40, %s41
      %p45 = pneg %p39
      %p46 = scmp.eq.s32.totalorder %s18, 1
      %p47 = por %p45, %p46
      %p48 = scmp.ne.s32.totalorder %s40, %s43
      %p49 = scmp.eq.s32.totalorder %s18, 0
      %p50 = por %p48, %p49
      %p51 = scmp.ne.s32.totalorder %s40, %s43
      %p52 = scmp.eq.s32.totalorder %s23, 1
      %p53 = por %p51, %p52
      %p54 = scmp.ne.s32.totalorder %s43, %s44
      %p55 = scmp.eq.s32.totalorder %s23, 0
      %p56 = por %p54, %p55
      %p57 = scmp.ne.s32.totalorder %s43, %s44
      %p58 = scmp.eq.s32.totalorder %s24, 1
      %p59 = por %p57, %p58
      %p61 = scmp.ne.s32.totalorder %s44, %s60
      %p62 = scmp.eq.s32.totalorder %s24, 0
      %p63 = por %p61, %p62
      %s65 = sadd.s32 %s64, 1
      %p68 = scmp.eq.s32.totalorder %s18, 1
      %p69 = scmp.ne.s32.totalorder %s64, %s66
      %p70 = scmp.eq.s32.totalorder %s18, 0
      %p71 = por %p69, %p70
      %p72 = scmp.ne.s32.totalorder %s64, %s66
      %p73 = scmp.eq.s32.totalorder %s23, 1
      %p74 = por %p72, %p73
      %p75 = scmp.ne.s32.totalorder %s66, %s67
      %p76 = scmp.eq.s32.totalorder %s23, 0
      %p77 = por %p75, %p76
      %p78 = scmp.ne.s32.totalorder %s66, %s67
      %p79 = scmp.eq.s32.totalorder %s24, 1
      %p80 = por %p78, %p79
      %p82 = scmp.ne.s32.totalorder %s67, %s81
      %p83 = scmp.eq.s32.totalorder %s24, 0
      %p84 = por %p82, %p83
      %s86 = sadd.s32 %s85, 1
      %p89 = scmp.eq.s32.totalorder %s18, 1
      %p90 = scmp.ne.s32.totalorder %s85, %s87
      %p91 = scmp.eq.s32.totalorder %s18, 0
      %p92 = por %p90, %p91
      %p93 = scmp.ne.s32.totalorder %s85, %s87
      %p94 = scmp.eq.s32.totalorder %s23, 1
      %p95 = por %p93, %p94
      %p96 = scmp.ne.s32.totalorder %s87, %s88
      %p97 = scmp.eq.s32.totalorder %s23, 0
      %p98 = por %p96, %p97
      %p99 = scmp.ne.s32.totalorder %s87, %s88
      %p100 = scmp.eq.s32.totalorder %s24, 1
      %p101 = por %p99, %p100
      %p103 = scmp.ne.s32.totalorder %s88, %s102
      %p104 = scmp.eq.s32.totalorder %s24, 0
      %p105 = por %p103, %p104
      %s106 = ssub.s32 %s26, %s33
      %p107 = scmp.eq.s32.totalorder %s106, 0
      %s109 = sadd.s32 %s108, 1
      %s110 = scalar_select %p107, %s108, %s109
      %p113 = pneg %p107
      %p114 = scmp.eq.s32.totalorder %s18, 1
      %p115 = por %p113, %p114
      %p116 = scmp.ne.s32.totalorder %s108, %s111
      %p117 = scmp.eq.s32.totalorder %s18, 0
      %p118 = por %p116, %p117
      %p119 = scmp.ne.s32.totalorder %s108, %s111
      %p120 = scmp.eq.s32.totalorder %s23, 1
      %p121 = por %p119, %p120
      %p122 = scmp.ne.s32.totalorder %s111, %s112
      %p123 = scmp.eq.s32.totalorder %s23, 0
      %p124 = por %p122, %p123
      %p125 = scmp.ne.s32.totalorder %s111, %s112
      %p126 = scmp.eq.s32.totalorder %s24, 1
      %p127 = por %p125, %p126
      %p129 = scmp.ne.s32.totalorder %s112, %s128
      %p130 = scmp.eq.s32.totalorder %s24, 0
      %p131 = por %p129, %p130
      %s132 = ssub.s32 %s26, %s33
      %p133 = scmp.eq.s32.totalorder %s132, 0
      %s135 = sadd.s32 %s134, 1
      %s136 = scalar_select %p133, %s134, %s135
      %p139 = pneg %p133
      %p140 = scmp.eq.s32.totalorder %s18, 1
      %p141 = por %p139, %p140
      %p142 = scmp.ne.s32.totalorder %s134, %s137
      %p143 = scmp.eq.s32.totalorder %s18, 0
      %p144 = por %p142, %p143
      %p145 = scmp.ne.s32.totalorder %s134, %s137
      %p146 = scmp.eq.s32.totalorder %s23, 1
      %p147 = por %p145, %p146
      %p148 = scmp.ne.s32.totalorder %s137, %s138
      %p149 = scmp.eq.s32.totalorder %s23, 0
      %p150 = por %p148, %p149
      %p151 = scmp.ne.s32.totalorder %s137, %s138
      %p152 = scmp.eq.s32.totalorder %s24, 1
      %p153 = por %p151, %p152
      %p155 = scmp.ne.s32.totalorder %s138, %s154
      %p156 = scmp.eq.s32.totalorder %s24, 0
      %p157 = por %p155, %p156
      %s158 = ssub.s32 %s25, %s37
      %s159 = ssub.s32 %s26, %s33
      %s160 = sor.u32 %s158, %s159
      %p161 = scmp.eq.s32.totalorder %s160, 0
      %s163 = sadd.s32 %s162, 1
      %s164 = scalar_select %p161, %s162, %s163
      %p167 = pneg %p161
      %p168 = scmp.eq.s32.totalorder %s18, 1
      %p169 = por %p167, %p168
      %p170 = scmp.ne.s32.totalorder %s162, %s165
      %p171 = scmp.eq.s32.totalorder %s18, 0
      %p172 = por %p170, %p171
      %p173 = scmp.ne.s32.totalorder %s162, %s165
      %p174 = scmp.eq.s32.totalorder %s23, 1
      %p175 = por %p173, %p174
      %p176 = scmp.ne.s32.totalorder %s165, %s166
      %p177 = scmp.eq.s32.totalorder %s23, 0
      %p178 = por %p176, %p177
      %p179 = scmp.ne.s32.totalorder %s165, %s166
      %p180 = scmp.eq.s32.totalorder %s24, 1
      %p181 = por %p179, %p180
      %p183 = scmp.ne.s32.totalorder %s166, %s182
      %p184 = scmp.eq.s32.totalorder %s24, 0
      %p185 = por %p183, %p184
      %p186 = scmp.le.s32.totalorder 1, %s18
      %p187 = scmp.lt.s32.totalorder %s18, 3
      %p188 = pnand %p186, %p187
      %p189 = pneg %p188
      // Predicated region
      $region9: #{tpu_custom_call.1} parent=5 // pred_check
        _
      $region10: #{tpu_custom_call.1} parent=5 // pred_check_branch
        %191 = sbr.rel (%p188) target = $region12
      $region11: #{tpu_custom_call.1} parent=5 // pred_region
        %s192 = ssub.s32 %s18, 1
        // Predicated region
        $region13: #{tpu_custom_call.1} parent=11 // pred_check
          %p193 = pneg %p77
        $region14: #{tpu_custom_call.1} parent=11 // pred_check_branch
          %195 = sbr.rel (%p193) target = $region16
        $region15: #{tpu_custom_call.1} parent=11 // pred_region
          %197 = vsyncadd [#allocation7], 0
          %s198 = sshll.u32 %s1, 4
          %s199 = int_to_ptr.hbm [resolvable:$true] %s198
          %s200 = sshll.u32 [#allocation6], 4
          %s201 = int_to_ptr.vmem [resolvable:$true] %s200
          %206 = dma.hbm_to_vmem [thread:$0]  %s199, 256, %s201, [#allocation7], 64, 64, 4
        $region16: #{tpu_custom_call.1} parent=11 // pred_fallthru
          _
        // Predicated region
        $region17: #{tpu_custom_call.1} parent=11 // pred_check
          %p207 = pneg %p98
        $region18: #{tpu_custom_call.1} parent=11 // pred_check_branch
          %209 = sbr.rel (%p207) target = $region20
        $region19: #{tpu_custom_call.1} parent=11 // pred_region
          _
        $region20: #{tpu_custom_call.1} parent=11 // pred_fallthru
          _
        // Predicated region
        $region21: #{tpu_custom_call.1} parent=11 // pred_check
          %p210 = pneg %p124
        $region22: #{tpu_custom_call.1} parent=11 // pred_check_branch
          %212 = sbr.rel (%p210) target = $region24
        $region23: #{tpu_custom_call.1} parent=11 // pred_region
          %214 = vsyncadd [#allocation7], 0
          %s215 = smul.addr %s28, 4
          %s216 = scalar_lea.hbm %s3, %s215
          %s217 = sshll.u32 %s216, 4
          %s218 = int_to_ptr.hbm [resolvable:$true] %s217
          %s219 = sshll.u32 [#allocation8], 4
          %s220 = int_to_ptr.vmem [resolvable:$true] %s219
          %225 = dma.hbm_to_vmem [thread:$0]  %s218, 256, %s220, [#allocation7], 64, 64, 4
        $region24: #{tpu_custom_call.1} parent=11 // pred_fallthru
          _
        // Predicated region
        $region25: #{tpu_custom_call.1} parent=11 // pred_check
          %p226 = pneg %p150
        $region26: #{tpu_custom_call.1} parent=11 // pred_check_branch
          %228 = sbr.rel (%p226) target = $region28
        $region27: #{tpu_custom_call.1} parent=11 // pred_region
          %p229 = scmp.lt.s32.totalorder %s28, 0
          %s230 = scalar_select %p229, %s28, 0
          %s231 = scalar_lea.vmem %s4, %s230
        $region28: #{tpu_custom_call.1} parent=11 // pred_fallthru
          _
      $region12: #{tpu_custom_call.1} parent=5 // pred_fallthru
        _
      %p232 = scmp.lt.s32.totalorder %s18, 2
      // Predicated region
      $region29: #{tpu_custom_call.1} parent=5 // pred_check
        %p233 = pneg %p232
      $region30: #{tpu_custom_call.1} parent=5 // pred_check_branch
        %235 = sbr.rel (%p233) target = $region32
      $region31: #{tpu_custom_call.1} parent=5 // pred_region
        // Predicated region
        $region33: #{tpu_custom_call.1} parent=31 // pred_check
          %p236 = pneg %p50
        $region34: #{tpu_custom_call.1} parent=31 // pred_check_branch
          %238 = sbr.rel (%p236) target = $region36
        $region35: #{tpu_custom_call.1} parent=31 // pred_region
          %s239 = sand.u32 %s40, 1
          %s240 = scalar_lea.sflag [#allocation4], %s239
          %s241 = sand.u32 %s40, 1
          %s242 = smul.addr %s241, 8
          %s243 = scalar_lea.vmem [#allocation3], %s242
          %245 = vsyncadd %s240, 0
          %s246 = smul.addr %s25, 8
          %s247 = scalar_lea.hbm %s0, %s246
          %s249 = sshll.u32 %s247, 4
          %s250 = int_to_ptr.hbm [resolvable:$true] %s249
          %s251 = sshll.u32 %s243, 4
          %s252 = int_to_ptr.vmem [resolvable:$true] %s251
          %254 = dma.hbm_to_vmem [thread:$0]  %s250, 128, %s252, %s240
        $region36: #{tpu_custom_call.1} parent=31 // pred_fallthru
          _
      $region32: #{tpu_custom_call.1} parent=5 // pred_fallthru
        _
      %p255 = scmp.le.s32.totalorder 1, %s18
      %p256 = scmp.lt.s32.totalorder %s18, 3
      %p257 = pnand %p255, %p256
      %p258 = pneg %p257
      // Predicated region
      $region37: #{tpu_custom_call.1} parent=5 // pred_check
        _
      $region38: #{tpu_custom_call.1} parent=5 // pred_check_branch
        %260 = sbr.rel (%p257) target = $region40
      $region39: #{tpu_custom_call.1} parent=5 // pred_region
        %s261 = ssub.s32 %s18, 1
        %s262 = sand.u32 %s43, 1
        %s263 = scalar_lea.sflag [#allocation4], %s262
        %s264 = sand.u32 %s43, 1
        %s265 = smul.addr %s264, 8
        %s266 = scalar_lea.vmem [#allocation3], %s265
        // Predicated region
        $region41: #{tpu_custom_call.1} parent=39 // pred_check
          %p267 = pneg %p56
        $region42: #{tpu_custom_call.1} parent=39 // pred_check_branch
          %269 = sbr.rel (%p267) target = $region44
        $region43: #{tpu_custom_call.1} parent=39 // pred_region
          %271 = dma.done %s263, 128
        $region44: #{tpu_custom_call.1} parent=39 // pred_fallthru
          _
        // Predicated region
        $region45: #{tpu_custom_call.1} parent=39 // pred_check
          %p272 = pneg %p77
        $region46: #{tpu_custom_call.1} parent=39 // pred_check_branch
          %274 = sbr.rel (%p272) target = $region48
        $region47: #{tpu_custom_call.1} parent=39 // pred_region
          %276 = dma.done [#allocation7], 256
        $region48: #{tpu_custom_call.1} parent=39 // pred_fallthru
          _
        // Predicated region
        $region49: #{tpu_custom_call.1} parent=39 // pred_check
          %p277 = pneg %p124
        $region50: #{tpu_custom_call.1} parent=39 // pred_check_branch
          %279 = sbr.rel (%p277) target = $region52
        $region51: #{tpu_custom_call.1} parent=39 // pred_region
          %281 = dma.done [#allocation7], 256
        $region52: #{tpu_custom_call.1} parent=39 // pred_fallthru
          _
        %s282 = sand.u32 %s43, 1
        %s283 = scalar_lea.sflag [#allocation4], %s282
        %s284 = sand.u32 %s43, 1
        %s285 = smul.addr %s284, 8
        %s286 = scalar_lea.vmem [#allocation3], %s285
        %p287 = pneg %p56
        %p288 = pneg %p53
        %p289 = pneg %p77
        %p290 = pneg %p74
        %p291 = pneg %p98
        %p292 = pneg %p95
        %p293 = pneg %p124
        %p294 = pneg %p121
        %p295 = scmp.lt.s32.totalorder %s28, 0
        %s296 = scalar_select %p295, %s28, 0
        %s297 = scalar_lea.vmem %s4, %s296
        %p298 = pneg %p150
        %p299 = pneg %p147
        %p300 = pneg %p178
        %p301 = pneg %p175
        %s302 = sand.u32 %s165, 1
        %s303 = scalar_lea.sflag [#allocation5], %s302
        %s304 = sand.u32 %s165, 1
        %s305 = smul.addr %s304, 8
        %s306 = scalar_lea.vmem [#allocation9], %s305
        %p307 = scmp.lt.s32.totalorder %s28, 0
        %s308 = scalar_select %p307, %s28, 0
        %s309 = scalar_lea.vmem %s4, %s308
        %p311 = scmp.eq.s32.totalorder %s28, 0
        // Predicated region
        $region53: #{tpu_custom_call.1} parent=39 // pred_check
          %p312 = pneg %p311
        $region54: #{tpu_custom_call.1} parent=39 // pred_check_branch
          %314 = sbr.rel (%p312) target = $region56
        $region55: #{tpu_custom_call.1} parent=39 // pred_region
          %v315 = vld [vmem:[%s266] sm:$0xff]
          %v316 = vpack.c.bf16 %v315, %v315
          %v317 = vld [vmem:[#allocation6] sm:$0xf]
          %v318 = vld [vmem:[#allocation6 + $0x4] sm:$0xf]
          %v319 = vld [vmem:[#allocation6 + $0x8] sm:$0xf]
          %v320 = vld [vmem:[#allocation6 + $0xc] sm:$0xf]
          %v321 = vld [vmem:[%s2] sm:$0x1]
          %v323 = vperm.slane %v321, 0
          %v329 = vunpack.c.l.b16 %v317
          %v330 = vunpack.c.l.b16 %v318
          %v331 = vunpack.c.l.b16 %v319
          %v332 = vunpack.c.l.b16 %v320
          %v333 = vpack.c.b16 %v330, %v329
          %v334 = vpack.c.b16 %v332, %v331
          %vm337 = vcmask 261120
          %v339 = vsel %vm337, %v316, 0
          %341 = vmatpush.bf16.msra.mxu0 0
          %342 = vmatpush.bf16.msra.mxu0 0
          %343 = vmatpush.bf16.msra.mxu0 0
          %344 = vmatpush.bf16.msra.mxu0 0
          %345 = vmatpush.bf16.msra.mxu0 0
          %346 = vmatpush.bf16.msra.mxu0 0
          %347 = vmatpush.bf16.msra.mxu0 %v334
          %348 = vmatpush.bf16.msra.mxu0 %v333
          %349 = vmatmul.bf16.gmra.mxu0 %v339
          %v350 = vpop.f32.mrf.mxu0
          %v351 = vadd.f32 %v323, %v350
          %v352 = vpop.f32.mrf.mxu0
          %353 = vdwg.mxu0
          %v354 = vmax.f32 %v351, 0.0
          %v355 = vpack.c.bf16 %v354, %v354
          %vm356 = vcmask 257024
          %357 = vst.msk [vmem:[#allocation2] sm:$0xf] %vm356, %v355
        $region56: #{tpu_custom_call.1} parent=39 // pred_fallthru
          _
        %v358 = vld [vmem:[#allocation2] sm:$0xf]
        %v359 = vld [vmem:[#allocation8] sm:$0xf]
        %v360 = vld [vmem:[#allocation8 + $0x4] sm:$0xf]
        %v361 = vld [vmem:[#allocation8 + $0x8] sm:$0xf]
        %v362 = vld [vmem:[#allocation8 + $0xc] sm:$0xf]
        %v363 = vld [vmem:[%s309] sm:$0x1]
        %v365 = vperm.slane %v363, 0
        %v371 = vunpack.c.l.b16 %v359
        %v372 = vunpack.c.l.b16 %v360
        %v373 = vunpack.c.l.b16 %v361
        %v374 = vunpack.c.l.b16 %v362
        %v375 = vpack.c.b16 %v372, %v371
        %v376 = vpack.c.b16 %v374, %v373
        %vm379 = vcmask 261120
        %v381 = vsel %vm379, %v358, 0
        %383 = vmatpush.bf16.msra.mxu0 0
        %384 = vmatpush.bf16.msra.mxu0 0
        %385 = vmatpush.bf16.msra.mxu0 0
        %386 = vmatpush.bf16.msra.mxu0 0
        %387 = vmatpush.bf16.msra.mxu0 0
        %388 = vmatpush.bf16.msra.mxu0 0
        %389 = vmatpush.bf16.msra.mxu0 %v376
        %390 = vmatpush.bf16.msra.mxu0 %v375
        %391 = vmatmul.bf16.gmra.mxu0 %v381
        %v392 = vpop.f32.mrf.mxu0
        %v393 = vadd.f32 %v365, %v392
        %v394 = vpop.f32.mrf.mxu0
        %395 = vdwg.mxu0
        %396 = vst.msk [vmem:[%s306] sm:$0xff] %vm379, %v393
        %s397 = sand.u32 %s165, 1
        %s398 = scalar_lea.sflag [#allocation5], %s397
        %s399 = sand.u32 %s165, 1
        %s400 = smul.addr %s399, 8
        %s401 = scalar_lea.vmem [#allocation9], %s400
        // Predicated region
        $region57: #{tpu_custom_call.1} parent=39 // pred_check
          %p402 = pneg %p175
        $region58: #{tpu_custom_call.1} parent=39 // pred_check_branch
          %404 = sbr.rel (%p402) target = $region60
        $region59: #{tpu_custom_call.1} parent=39 // pred_region
          %406 = vsyncadd %s398, 0
          %s407 = sadd.s32 %s28, %s27
          %s408 = smul.addr %s407, 8
          %s409 = scalar_lea.hbm %s5, %s408
          %s411 = sshll.u32 %s401, 4
          %s412 = int_to_ptr.vmem [resolvable:$true] %s411
          %s413 = sshll.u32 %s409, 4
          %s414 = int_to_ptr.hbm [resolvable:$true] %s413
          %416 = dma.vmem_to_hbm [thread:$0]  %s412, 128, %s414, %s398
        $region60: #{tpu_custom_call.1} parent=39 // pred_fallthru
          _
      $region40: #{tpu_custom_call.1} parent=5 // pred_fallthru
        _
      %p417 = scmp.le.s32.totalorder 2, %s18
      // Predicated region
      $region61: #{tpu_custom_call.1} parent=5 // pred_check
        %p418 = pneg %p417
      $region62: #{tpu_custom_call.1} parent=5 // pred_check_branch
        %420 = sbr.rel (%p418) target = $region64
      $region63: #{tpu_custom_call.1} parent=5 // pred_region
        %s421 = ssub.s32 %s18, 2
        // Predicated region
        $region65: #{tpu_custom_call.1} parent=63 // pred_check
          %p422 = pneg %p181
        $region66: #{tpu_custom_call.1} parent=63 // pred_check_branch
          %424 = sbr.rel (%p422) target = $region68
        $region67: #{tpu_custom_call.1} parent=63 // pred_region
          %s425 = sand.u32 %s166, 1
          %s426 = scalar_lea.sflag [#allocation5], %s425
          %s427 = sand.u32 %s166, 1
          %s428 = smul.addr %s427, 8
          %s429 = scalar_lea.vmem [#allocation9], %s428
          %431 = dma.done %s426, 128
        $region68: #{tpu_custom_call.1} parent=63 // pred_fallthru
          _
      $region64: #{tpu_custom_call.1} parent=5 // pred_fallthru
        _
    $region6: #{tpu_custom_call.1} parent=1 // loop_footer
      %s22 = sadd.s32 1, %s18
    $region7: #{tpu_custom_call.1} parent=1 // loop_footer_branch
      %17 = sbr.rel target = $region3
    $region8: #{tpu_custom_call.1} parent=1 // loop_exit
      _
    %432 = vsyncpa [#allocation4], 1
    %s433 = scalar_lea.sflag [#allocation4], 1
    %434 = vsyncpa %s433, 1
    %435 = vsyncpa [#allocation7], 1
    %436 = vsyncpa [#allocation5], 1
    %s437 = scalar_lea.sflag [#allocation5], 1
    %438 = vsyncpa %s437, 1

</llo_original>
